<compile_context>
chip_gen: v7x
topology: tpu7x:2x2x1
jax: 0.10.0
libtpu: 0.0.40
codegen_flags: <defaults>
</compile_context>

<pallas_src>
import jax
import jax.numpy as jnp
from jax import lax
from jax.experimental import pallas as pl
from jax.experimental.pallas import tpu as pltpu

K = 3  # MaxPool2d(kernel_size=3) -> stride defaults to 3


def maxpool3x3_kernel(x_ref, o_ref):
    # x_ref: (9, Bh, Wo, Bc)  -- [window tap, out_row, out_col, channel]
    # o_ref: (Bh, Wo, Bc)
    # Balanced max tree (critical path 4 maxima instead of an 8-deep chain).
    vals = [x_ref[k] for k in range(K * K)]
    while len(vals) > 1:
        nxt = [jnp.maximum(vals[2 * j], vals[2 * j + 1])
               for j in range(len(vals) // 2)]
        if len(vals) % 2:
            nxt.append(vals[-1])
        vals = nxt
    o_ref[...] = vals[0]


def maxpool2d_k3(x, *, vmem_budget_bytes=24 * 1024 * 1024):
    """MaxPool2d(kernel_size=3, stride=3, ceil_mode=False) on NCHW input."""
    N, C, H, W = x.shape
    Ho, Wo = H // K, W // K
    assert Ho >= 1 and Wo >= 1, "spatial dims must be >= kernel_size"
    NC = N * C
    itemsize = jnp.dtype(x.dtype).itemsize

    # ---- wrapper-side layout plumbing (XLA) -------------------------------
    # (NC, H, W) -> crop -> (NC, Ho, K, Wo, K) -> (K, K, Ho, Wo, NC) -> merge.
    xf = x.reshape(NC, H, W)[:, : K * Ho, : K * Wo].reshape(NC, Ho, K, Wo, K)
    xt = jnp.transpose(xf, (2, 4, 1, 3, 0)).reshape(K * K, Ho, Wo, NC)

    # ---- choose channel / row block sizes against the VMEM budget ---------
    LANE = 128
    sub = max(8, 32 // itemsize)          # sublane tile for this dtype
    Wop = -(-Wo // sub) * sub             # in-VMEM sublane padding of Wo axis
    # double-buffered input block (9 taps) + double-buffered output block
    per_row_chan = 2 * (K * K + 1) * Wop * itemsize   # bytes per (row, chan)

    if NC <= LANE:
        Bc = NC                            # full last dim is always legal
    else:
        Bc = max(LANE,
                 (vmem_budget_bytes // (per_row_chan * Ho)) // LANE * LANE)
        Bc = min(Bc, -(-NC // LANE) * LANE)

    if per_row_chan * Ho * Bc <= vmem_budget_bytes:
        Bh = Ho                            # common case: whole image height
    else:
        Bh = max(1, vmem_budget_bytes // (per_row_chan * Bc))
        Bh = min(Bh, Ho)

    NCp = -(-NC // Bc) * Bc
    Hop = -(-Ho // Bh) * Bh
    if NCp != NC or Hop != Ho:
        xt = jnp.pad(xt, ((0, 0), (0, Hop - Ho), (0, 0), (0, NCp - NC)))

    grid = (NCp // Bc, Hop // Bh)

    out_t = pl.pallas_call(
        maxpool3x3_kernel,
        out_shape=jax.ShapeDtypeStruct((Hop, Wo, NCp), x.dtype),
        grid_spec=pltpu.PrefetchScalarGridSpec(
            num_scalar_prefetch=0,
            grid=grid,
            in_specs=[
                pl.BlockSpec((K * K, Bh, Wo, Bc), lambda i, h: (0, h, 0, i)),
            ],
            out_specs=pl.BlockSpec((Bh, Wo, Bc), lambda i, h: (h, 0, i)),
        ),
        compiler_params=pltpu.CompilerParams(
            dimension_semantics=("parallel", "parallel"),
            vmem_limit_bytes=32 * 1024 * 1024,
        ),
    )(xt)

    out = out_t[:Ho, :, :NC]                # drop row / channel padding
    out = jnp.transpose(out, (2, 0, 1))     # back to (NC, Ho, Wo)
    return out.reshape(N, C, Ho, Wo)


if __name__ == "__main__":
    key = jax.random.PRNGKey(0)
    # Small NCHW input consistent with the module's forward.
    x = jax.random.normal(key, (2, 4, 16, 16), dtype=jnp.float32)

    out = maxpool2d_k3(x)
    out = jax.block_until_ready(out)

    # Pure-JAX reference: MaxPool2d(kernel_size=3, stride=3, ceil_mode=False)
    ref = lax.reduce_window(
        x, -jnp.inf, lax.max,
        window_dimensions=(1, 1, 3, 3),
        window_strides=(1, 1, 3, 3),
        padding="VALID",
    )

    assert out.shape == (2, 4, 5, 5), out.shape
    assert out.dtype == x.dtype
    assert jnp.allclose(out, ref, rtol=1e-6, atol=1e-6), "mismatch vs reference"

    print("KERNEL_OK")
</pallas_src>

<mosaic_0001>
module attributes {stable_mosaic.version = 11 : i64} {
  func.func @maxpool3x3_kernel(%arg0: i32, %arg1: i32, %arg2: memref<9x5x5x8xf32, #tpu.memory_space<vmem>>, %arg3: memref<5x5x8xf32, #tpu.memory_space<vmem>>) attributes {dimension_semantics = [#tpu.dimension_semantics<parallel>, #tpu.dimension_semantics<parallel>], iteration_bounds = array<i64: 1, 1>, scalar_prefetch = 0 : i64, scratch_operands = 0 : i64, tpu.core_type = #tpu.core_type<tc>, window_params = [{transform_indices = @transform_0, window_bounds = array<i64: 9, 5, 5, 8>}, {transform_indices = @transform_1, window_bounds = array<i64: 5, 5, 8>}]} {
    %c0 = arith.constant 0 : index
    %c0_0 = arith.constant 0 : index
    %c0_1 = arith.constant 0 : index
    %c0_2 = arith.constant 0 : index
    %0 = vector.load %arg2[%c0, %c0_0, %c0_1, %c0_2] : memref<9x5x5x8xf32, #tpu.memory_space<vmem>>, vector<1x5x5x8xf32>
    %1 = vector.shape_cast %0 : vector<1x5x5x8xf32> to vector<5x5x8xf32>
    %c1 = arith.constant 1 : index
    %c0_3 = arith.constant 0 : index
    %c0_4 = arith.constant 0 : index
    %c0_5 = arith.constant 0 : index
    %2 = vector.load %arg2[%c1, %c0_3, %c0_4, %c0_5] : memref<9x5x5x8xf32, #tpu.memory_space<vmem>>, vector<1x5x5x8xf32>
    %3 = vector.shape_cast %2 : vector<1x5x5x8xf32> to vector<5x5x8xf32>
    %c2 = arith.constant 2 : index
    %c0_6 = arith.constant 0 : index
    %c0_7 = arith.constant 0 : index
    %c0_8 = arith.constant 0 : index
    %4 = vector.load %arg2[%c2, %c0_6, %c0_7, %c0_8] : memref<9x5x5x8xf32, #tpu.memory_space<vmem>>, vector<1x5x5x8xf32>
    %5 = vector.shape_cast %4 : vector<1x5x5x8xf32> to vector<5x5x8xf32>
    %c3 = arith.constant 3 : index
    %c0_9 = arith.constant 0 : index
    %c0_10 = arith.constant 0 : index
    %c0_11 = arith.constant 0 : index
    %6 = vector.load %arg2[%c3, %c0_9, %c0_10, %c0_11] : memref<9x5x5x8xf32, #tpu.memory_space<vmem>>, vector<1x5x5x8xf32>
    %7 = vector.shape_cast %6 : vector<1x5x5x8xf32> to vector<5x5x8xf32>
    %c4 = arith.constant 4 : index
    %c0_12 = arith.constant 0 : index
    %c0_13 = arith.constant 0 : index
    %c0_14 = arith.constant 0 : index
    %8 = vector.load %arg2[%c4, %c0_12, %c0_13, %c0_14] : memref<9x5x5x8xf32, #tpu.memory_space<vmem>>, vector<1x5x5x8xf32>
    %9 = vector.shape_cast %8 : vector<1x5x5x8xf32> to vector<5x5x8xf32>
    %c5 = arith.constant 5 : index
    %c0_15 = arith.constant 0 : index
    %c0_16 = arith.constant 0 : index
    %c0_17 = arith.constant 0 : index
    %10 = vector.load %arg2[%c5, %c0_15, %c0_16, %c0_17] : memref<9x5x5x8xf32, #tpu.memory_space<vmem>>, vector<1x5x5x8xf32>
    %11 = vector.shape_cast %10 : vector<1x5x5x8xf32> to vector<5x5x8xf32>
    %c6 = arith.constant 6 : index
    %c0_18 = arith.constant 0 : index
    %c0_19 = arith.constant 0 : index
    %c0_20 = arith.constant 0 : index
    %12 = vector.load %arg2[%c6, %c0_18, %c0_19, %c0_20] : memref<9x5x5x8xf32, #tpu.memory_space<vmem>>, vector<1x5x5x8xf32>
    %13 = vector.shape_cast %12 : vector<1x5x5x8xf32> to vector<5x5x8xf32>
    %c7 = arith.constant 7 : index
    %c0_21 = arith.constant 0 : index
    %c0_22 = arith.constant 0 : index
    %c0_23 = arith.constant 0 : index
    %14 = vector.load %arg2[%c7, %c0_21, %c0_22, %c0_23] : memref<9x5x5x8xf32, #tpu.memory_space<vmem>>, vector<1x5x5x8xf32>
    %15 = vector.shape_cast %14 : vector<1x5x5x8xf32> to vector<5x5x8xf32>
    %c8 = arith.constant 8 : index
    %c0_24 = arith.constant 0 : index
    %c0_25 = arith.constant 0 : index
    %c0_26 = arith.constant 0 : index
    %16 = vector.load %arg2[%c8, %c0_24, %c0_25, %c0_26] : memref<9x5x5x8xf32, #tpu.memory_space<vmem>>, vector<1x5x5x8xf32>
    %17 = vector.shape_cast %16 : vector<1x5x5x8xf32> to vector<5x5x8xf32>
    %18 = arith.maximumf %1, %3 : vector<5x5x8xf32>
    %19 = arith.maximumf %5, %7 : vector<5x5x8xf32>
    %20 = arith.maximumf %9, %11 : vector<5x5x8xf32>
    %21 = arith.maximumf %13, %15 : vector<5x5x8xf32>
    %22 = arith.maximumf %18, %19 : vector<5x5x8xf32>
    %23 = arith.maximumf %20, %21 : vector<5x5x8xf32>
    %24 = arith.maximumf %22, %23 : vector<5x5x8xf32>
    %25 = arith.maximumf %24, %17 : vector<5x5x8xf32>
    %c0_27 = arith.constant 0 : index
    %c0_28 = arith.constant 0 : index
    %c0_29 = arith.constant 0 : index
    %26 = vector.load %arg3[%c0_27, %c0_28, %c0_29] : memref<5x5x8xf32, #tpu.memory_space<vmem>>, vector<5x5x8xf32>
    tpu.vector_store %arg3[%c0_27, %c0_28, %c0_29], %25 {strides = array<i32>} : memref<5x5x8xf32, #tpu.memory_space<vmem>>, vector<5x5x8xf32>,
    return
  }
  func.func @transform_0(%arg0: i32, %arg1: i32) -> (i32, i32, i32, i32) {
    %c0_i32 = arith.constant 0 : i32
    %c0_i32_0 = arith.constant 0 : i32
    %c0_i32_1 = arith.constant 0 : i32
    return %c0_i32, %arg1, %c0_i32_0, %arg0 : i32, i32, i32, i32
  }
  func.func @transform_1(%arg0: i32, %arg1: i32) -> (i32, i32, i32) {
    %c0_i32 = arith.constant 0 : i32
    %c0_i32_0 = arith.constant 0 : i32
    return %arg1, %c0_i32, %arg0 : i32, i32, i32
  }
}

</mosaic_0001>

<llo_original>
// kernel: tpu_custom_call.1
$region0: #{tpu_custom_call.1}
  #allocation0 [shape = 'u32[]', space=smem, size = 0x4, offset = 0x4, fixed_abs, tag = 'smem constant byte address 0x4 - core index']
  #allocation1 [shape = 'u32[144,128]{1,0:T(1,128)}', space=vmem, size = 0x12000, scoped, tag = 'internal scratch']
  %s0 = inlined_call_operand.vmem [shape: f32[9,5,5,8], index: 0, kind: input, shape index: {}]
  %s1 = inlined_call_operand.hbm [shape: f32[5,5,8], index: 1, kind: output, shape index: {}]
  %s2 = sld [smem:[#allocation0]]
  $region14: #{tpu_custom_call.1} parent=0
    _
  %s4 = ssub.s32 1, %s2
  %s5 = scalar_select 0, %s4, %s2
  $region1: #{tpu_custom_call.1} parent=0
    #allocation2 [shape = 'u8[20480]{0}', space=vmem, size = 0x5000, scoped, tag = 'output window, operand 0, single buffered']
    #allocation3 [shape = 's32[1]{0}', space=sflag, size = 0x4, scoped, tag = 'scoped memory for tpu_custom_call.1']
    %6 = vsyncpa [#allocation3], 0
    // Predicated region
    $region2: #{tpu_custom_call.1} parent=1 // pred_check
      _
    $region3: #{tpu_custom_call.1} parent=1 // pred_check_branch
      %8 = sbr.rel (0) target = $region5
    $region4: #{tpu_custom_call.1} parent=1 // pred_region
      _
    $region5: #{tpu_custom_call.1} parent=1 // pred_fallthru
      _
    %v9 = vld [vmem:[%s0] sm:$0x1f]
    %v10 = vld [vmem:[%s0 + $0x8] sm:$0x1f]
    %v11 = vld [vmem:[%s0 + $0x10] sm:$0x1f]
    %v12 = vld [vmem:[%s0 + $0x18] sm:$0x1f]
    %v13 = vld [vmem:[%s0 + $0x20] sm:$0x1f]
    %s14 = scalar_lea.vmem %s0, 40
    %v15 = vld [vmem:[%s14] sm:$0x1f]
    %v16 = vld [vmem:[%s14 + $0x8] sm:$0x1f]
    %v17 = vld [vmem:[%s14 + $0x10] sm:$0x1f]
    %v18 = vld [vmem:[%s14 + $0x18] sm:$0x1f]
    %v19 = vld [vmem:[%s14 + $0x20] sm:$0x1f]
    %s20 = scalar_lea.vmem %s0, 80
    %v21 = vld [vmem:[%s20] sm:$0x1f]
    %v22 = vld [vmem:[%s20 + $0x8] sm:$0x1f]
    %v23 = vld [vmem:[%s20 + $0x10] sm:$0x1f]
    %v24 = vld [vmem:[%s20 + $0x18] sm:$0x1f]
    %v25 = vld [vmem:[%s20 + $0x20] sm:$0x1f]
    %s26 = scalar_lea.vmem %s0, 120
    %v27 = vld [vmem:[%s26] sm:$0x1f]
    %v28 = vld [vmem:[%s26 + $0x8] sm:$0x1f]
    %v29 = vld [vmem:[%s26 + $0x10] sm:$0x1f]
    %v30 = vld [vmem:[%s26 + $0x18] sm:$0x1f]
    %v31 = vld [vmem:[%s26 + $0x20] sm:$0x1f]
    %s32 = scalar_lea.vmem %s0, 160
    %v33 = vld [vmem:[%s32] sm:$0x1f]
    %v34 = vld [vmem:[%s32 + $0x8] sm:$0x1f]
    %v35 = vld [vmem:[%s32 + $0x10] sm:$0x1f]
    %v36 = vld [vmem:[%s32 + $0x18] sm:$0x1f]
    %v37 = vld [vmem:[%s32 + $0x20] sm:$0x1f]
    %s38 = scalar_lea.vmem %s0, 200
    %v39 = vld [vmem:[%s38] sm:$0x1f]
    %v40 = vld [vmem:[%s38 + $0x8] sm:$0x1f]
    %v41 = vld [vmem:[%s38 + $0x10] sm:$0x1f]
    %v42 = vld [vmem:[%s38 + $0x18] sm:$0x1f]
    %v43 = vld [vmem:[%s38 + $0x20] sm:$0x1f]
    %s44 = scalar_lea.vmem %s0, 240
    %v45 = vld [vmem:[%s44] sm:$0x1f]
    %v46 = vld [vmem:[%s44 + $0x8] sm:$0x1f]
    %v47 = vld [vmem:[%s44 + $0x10] sm:$0x1f]
    %v48 = vld [vmem:[%s44 + $0x18] sm:$0x1f]
    %v49 = vld [vmem:[%s44 + $0x20] sm:$0x1f]
    %s50 = scalar_lea.vmem %s0, 280
    %v51 = vld [vmem:[%s50] sm:$0x1f]
    %v52 = vld [vmem:[%s50 + $0x8] sm:$0x1f]
    %v53 = vld [vmem:[%s50 + $0x10] sm:$0x1f]
    %v54 = vld [vmem:[%s50 + $0x18] sm:$0x1f]
    %v55 = vld [vmem:[%s50 + $0x20] sm:$0x1f]
    %s56 = scalar_lea.vmem %s0, 320
    %v57 = vld [vmem:[%s56] sm:$0x1f]
    %v58 = vld [vmem:[%s56 + $0x8] sm:$0x1f]
    %v59 = vld [vmem:[%s56 + $0x10] sm:$0x1f]
    %v60 = vld [vmem:[%s56 + $0x18] sm:$0x1f]
    %v61 = vld [vmem:[%s56 + $0x20] sm:$0x1f]
    %v62 = vmax.f32 %v9, %v15
    %v63 = vmax.f32 %v10, %v16
    %v64 = vmax.f32 %v11, %v17
    %v65 = vmax.f32 %v12, %v18
    %v66 = vmax.f32 %v13, %v19
    %v67 = vmax.f32 %v21, %v27
    %v68 = vmax.f32 %v22, %v28
    %v69 = vmax.f32 %v23, %v29
    %v70 = vmax.f32 %v24, %v30
    %v71 = vmax.f32 %v25, %v31
    %v72 = vmax.f32 %v33, %v39
    %v73 = vmax.f32 %v34, %v40
    %v74 = vmax.f32 %v35, %v41
    %v75 = vmax.f32 %v36, %v42
    %v76 = vmax.f32 %v37, %v43
    %v77 = vmax.f32 %v45, %v51
    %v78 = vmax.f32 %v46, %v52
    %v79 = vmax.f32 %v47, %v53
    %v80 = vmax.f32 %v48, %v54
    %v81 = vmax.f32 %v49, %v55
    %v82 = vmax.f32 %v62, %v67
    %v83 = vmax.f32 %v63, %v68
    %v84 = vmax.f32 %v64, %v69
    %v85 = vmax.f32 %v65, %v70
    %v86 = vmax.f32 %v66, %v71
    %v87 = vmax.f32 %v72, %v77
    %v88 = vmax.f32 %v73, %v78
    %v89 = vmax.f32 %v74, %v79
    %v90 = vmax.f32 %v75, %v80
    %v91 = vmax.f32 %v76, %v81
    %v92 = vmax.f32 %v82, %v87
    %v93 = vmax.f32 %v83, %v88
    %v94 = vmax.f32 %v84, %v89
    %v95 = vmax.f32 %v85, %v90
    %v96 = vmax.f32 %v86, %v91
    %v97 = vmax.f32 %v92, %v57
    %v98 = vmax.f32 %v93, %v58
    %v99 = vmax.f32 %v94, %v59
    %v100 = vmax.f32 %v95, %v60
    %v101 = vmax.f32 %v96, %v61
    %vm102 = vcmask 61440
    %103 = vst.msk [vmem:[#allocation2] sm:$0x1f] %vm102, %v97
    %104 = vst.msk [vmem:[#allocation2 + $0x8] sm:$0x1f] %vm102, %v98
    %105 = vst.msk [vmem:[#allocation2 + $0x10] sm:$0x1f] %vm102, %v99
    %106 = vst.msk [vmem:[#allocation2 + $0x18] sm:$0x1f] %vm102, %v100
    %107 = vst.msk [vmem:[#allocation2 + $0x20] sm:$0x1f] %vm102, %v101
    // Predicated region
    $region6: #{tpu_custom_call.1} parent=1 // pred_check
      _
    $region7: #{tpu_custom_call.1} parent=1 // pred_check_branch
      %109 = sbr.rel (0) target = $region9
    $region8: #{tpu_custom_call.1} parent=1 // pred_region
      %s111 = ssub.s32 640, 640
      %112 = vsyncadd [#allocation3], %s111
      %s113 = sshll.u32 [#allocation2], 4
      %s114 = int_to_ptr.vmem [resolvable:$true] %s113
      %119 = dma.vmem_to_hbm [thread:$0]  %s114, 640, %s1, [#allocation3], 128, 128, 8
    $region9: #{tpu_custom_call.1} parent=1 // pred_fallthru
      _
    // Predicated region
    $region10: #{tpu_custom_call.1} parent=1 // pred_check
      _
    $region11: #{tpu_custom_call.1} parent=1 // pred_check_branch
      %121 = sbr.rel (0) target = $region13
    $region12: #{tpu_custom_call.1} parent=1 // pred_region
      %122 = dma.done [#allocation3], 640
    $region13: #{tpu_custom_call.1} parent=1 // pred_fallthru
      _
    %123 = vsyncpa [#allocation3], 1

</llo_original>
